<compile_context>
chip_gen: v6e
topology: v6e:2x2x1
jax: 0.10.0
libtpu: 0.0.40
codegen_flags: <defaults>
</compile_context>

<pallas_src>
import functools

import jax
import jax.numpy as jnp
from jax import lax
from jax.experimental import pallas as pl
from jax.experimental.pallas import tpu as pltpu


def _nonlocal_kernel(x_full_ref, x_q_ref, wt_ref, bt_ref, wpg_ref, bpg_ref,
                     ww_ref, bw_ref, o_ref, *, c_out, fast):
    # x_full_ref: (1, C_in, N)  -- full key/value columns for this batch element
    # x_q_ref   : (1, C_in, TQ) -- query columns for this grid step
    x_full = x_full_ref[0].astype(jnp.float32)             # (C_in, N)
    x_q = x_q_ref[0].astype(jnp.float32)                   # (C_in, TQ)

    # phi, g and a constant-ones row (deferred softmax denominator) in a single
    # MXU pass over the stacked weight: wpg = [w_phi; w_g; 0], bpg = [...; 1].
    pg = jnp.dot(wpg_ref[...], x_full,
                 preferred_element_type=jnp.float32) + bpg_ref[...]    # (2*C_out+1, N)
    phi = pg[:c_out]                                        # (C_out, N)
    g_aug = pg[c_out:]                                      # (C_out+1, N); last row == 1

    # theta projection only over the query columns.
    theta = jnp.dot(wt_ref[...], x_q,
                    preferred_element_type=jnp.float32) + bt_ref[...]  # (C_out, TQ)

    # f1[i, j] = sum_c theta[c, i] * phi[c, j]   (contract channel dims, no .T)
    if fast:
        theta_m = theta.astype(jnp.bfloat16)
        phi_m = phi.astype(jnp.bfloat16)
    else:
        theta_m, phi_m = theta, phi
    f1 = lax.dot_general(theta_m, phi_m, (((0,), (0,)), ((), ())),
                         preferred_element_type=jnp.float32)           # (TQ, N)

    # Numerically stable *unnormalized* softmax weights; normalization deferred.
    p = jnp.exp(f1 - jnp.max(f1, axis=-1, keepdims=True))              # (TQ, N)

    # y_aug[c, i] = sum_j g_aug[c, j] * p[i, j]; last row == softmax denominator.
    if fast:
        g_m = g_aug.astype(jnp.bfloat16)
        p_m = p.astype(jnp.bfloat16)
    else:
        g_m, p_m = g_aug, p
    y_aug = lax.dot_general(g_m, p_m, (((1,), (1,)), ((), ())),
                            preferred_element_type=jnp.float32)        # (C_out+1, TQ)
    denom = y_aug[c_out:c_out + 1]                                     # (1, TQ)
    y = y_aug[:c_out] * pl.reciprocal(denom, approx=fast)              # (C_out, TQ)

    # W (1x1 conv C_out -> C_in) + residual; lane-dense store.
    w_y = jnp.dot(ww_ref[...], y,
                  preferred_element_type=jnp.float32) + bw_ref[...]    # (C_in, TQ)
    o_ref[0] = (w_y + x_q).astype(o_ref.dtype)


def _pick_tq(n):
    if n % 128 != 0:
        return n
    for cand in (512, 256, 128):
        if n % cand == 0:
            return cand
    return n


def non_local_block(x_nchw, params, *, tq=None, fast=True):
    """x_nchw: (B, C_in, H, W) float32. params: dict of conv weights/biases."""
    B, C_in, H, W = x_nchw.shape
    N = H * W
    C_out = params["wg"].shape[0]

    # Lane-dense layout straight from NCHW: (B, C_in, N).  No transposes.
    x_cn = x_nchw.reshape(B, C_in, N)

    if tq is None:
        tq = _pick_tq(N)
    assert N % tq == 0, "query tile must divide N"

    # Host-side weight packing (free, done once).  Stack phi & g plus a zero
    # weight row with bias 1.0 -> the projection's last row is exactly 1 and is
    # reused as the softmax denominator inside the attention matmul.
    w_t = params["wt"]                                             # (C_out, C_in)
    b_t = params["bt"].reshape(C_out, 1)
    w_pg = jnp.concatenate(
        [params["wp"], params["wg"], jnp.zeros((1, C_in), jnp.float32)],
        axis=0)                                                    # (2*C_out+1, C_in)
    b_pg = jnp.concatenate(
        [params["bp"], params["bg"], jnp.ones((1,), jnp.float32)],
        axis=0).reshape(2 * C_out + 1, 1)
    ww = params["ww"]                                              # (C_in, C_out)
    bw = params["bw"].reshape(C_in, 1)

    full = lambda a: pl.BlockSpec(a.shape, lambda b, q: (0,) * a.ndim)
    kernel = functools.partial(_nonlocal_kernel, c_out=C_out, fast=fast)

    # Explicit scoped-VMEM budget: double-buffered inputs/outputs + projections
    # + (tq, N) attention temporaries, with 2x headroom; clamp to [32, 64] MiB.
    est = 4 * (2 * (C_in * N + 2 * C_in * tq)
               + (2 * C_out + 1) * N + C_out * tq
               + 3 * tq * N
               + 2 * (C_out + 1) * tq
               + (3 * C_out + C_in + 2) * max(C_in, 128))
    vmem_limit = int(min(64 << 20, max(32 << 20, 2 * est)))

    # Advisory cost hint for XLA's scheduler.
    n_steps = B * (N // tq)
    flops = (2 * n_steps * (2 * C_out + 1) * C_in * N      # phi/g/ones projection
             + 2 * B * C_out * C_in * N                    # theta
             + 2 * B * N * N * C_out                       # theta^T @ phi
             + 2 * B * N * N * (C_out + 1)                 # attention @ g_aug
             + 2 * B * C_in * C_out * N)                   # W projection
    cost = pl.CostEstimate(
        flops=int(flops),
        transcendentals=int(B * N * N),
        bytes_accessed=int(4 * (3 * B * C_in * N
                                + (3 * C_out + 1) * C_in + C_in * C_out
                                + 3 * C_out + C_in + 1)),
    )

    out = pl.pallas_call(
        kernel,
        out_shape=jax.ShapeDtypeStruct((B, C_in, N), x_cn.dtype),
        grid_spec=pltpu.PrefetchScalarGridSpec(
            num_scalar_prefetch=0,
            grid=(B, N // tq),
            in_specs=[
                pl.BlockSpec((1, C_in, N), lambda b, q: (b, 0, 0)),    # x full (keys)
                pl.BlockSpec((1, C_in, tq), lambda b, q: (b, 0, q)),   # x query slice
                full(w_t), full(b_t),
                full(w_pg), full(b_pg),
                full(ww), full(bw),
            ],
            out_specs=pl.BlockSpec((1, C_in, tq), lambda b, q: (b, 0, q)),
        ),
        compiler_params=pltpu.CompilerParams(
            dimension_semantics=("parallel", "parallel"),
            vmem_limit_bytes=vmem_limit,
        ),
        cost_estimate=cost,
    )(x_cn, x_cn, w_t, b_t, w_pg, b_pg, ww, bw)

    return out.reshape(B, C_in, H, W)


def non_local_block_ref(x_nchw, params):
    """Pure-JAX reference mirroring the PyTorch forward (f32 everywhere)."""
    B, C_in, H, W = x_nchw.shape
    N = H * W
    C_out = params["wg"].shape[0]
    x = x_nchw.reshape(B, C_in, N)                                # (B, C_in, N)

    def conv1x1(w, b, inp):   # inp: (B, C, N) -> (B, C', N)
        return jnp.einsum("oc,bcn->bon", w, inp) + b[None, :, None]

    g_x = jnp.transpose(conv1x1(params["wg"], params["bg"], x), (0, 2, 1))
    theta_x = jnp.transpose(conv1x1(params["wt"], params["bt"], x), (0, 2, 1))
    phi_x = conv1x1(params["wp"], params["bp"], x)                # (B, C_out, N)
    f1 = jnp.matmul(theta_x, phi_x)                               # (B, N, N)
    f_div_c = jax.nn.softmax(f1, axis=-1)
    y = jnp.matmul(f_div_c, g_x)                                  # (B, N, C_out)
    y = jnp.transpose(y, (0, 2, 1)).reshape(B, C_out, H, W)
    w_y = (jnp.einsum("oc,bchw->bohw", params["ww"], y)
           + params["bw"][None, :, None, None])
    return w_y + x_nchw


def make_params(key, c_in, c_out, zero_W=True):
    ks = jax.random.split(key, 8)
    scale_in = 1.0 / jnp.sqrt(c_in)
    scale_out = 1.0 / jnp.sqrt(c_out)
    p = {
        "wg": jax.random.uniform(ks[0], (c_out, c_in), jnp.float32, -scale_in, scale_in),
        "bg": jax.random.uniform(ks[1], (c_out,), jnp.float32, -scale_in, scale_in),
        "wt": jax.random.uniform(ks[2], (c_out, c_in), jnp.float32, -scale_in, scale_in),
        "bt": jax.random.uniform(ks[3], (c_out,), jnp.float32, -scale_in, scale_in),
        "wp": jax.random.uniform(ks[4], (c_out, c_in), jnp.float32, -scale_in, scale_in),
        "bp": jax.random.uniform(ks[5], (c_out,), jnp.float32, -scale_in, scale_in),
    }
    if zero_W:
        # Faithful to the module __init__: nn.init.constant_(W.weight/bias, 0)
        p["ww"] = jnp.zeros((c_in, c_out), jnp.float32)
        p["bw"] = jnp.zeros((c_in,), jnp.float32)
    else:
        p["ww"] = jax.random.uniform(ks[6], (c_in, c_out), jnp.float32, -scale_out, scale_out)
        p["bw"] = jax.random.uniform(ks[7], (c_in,), jnp.float32, -scale_out, scale_out)
    return p


if __name__ == "__main__":
    key = jax.random.PRNGKey(0)
    k_x, k_p = jax.random.split(key)

    B, C_in, H, W = 2, 4, 16, 16
    C_out = 8
    x = jax.random.normal(k_x, (B, C_in, H, W), jnp.float32)

    # 1) Faithful init (W conv zeroed, as in the module __init__) -> z == x,
    #    even in fast (bf16/approx-rcp) mode.
    params_faithful = make_params(k_p, C_in, C_out, zero_W=True)
    z = jax.block_until_ready(non_local_block(x, params_faithful, fast=True))
    assert jnp.allclose(z, x, atol=1e-5, rtol=1e-5)

    # 2) Non-zero W, exact (f32-matmul) mode vs pure-JAX reference; also check
    #    the query-block (tq < N) path.
    params_nz = make_params(k_p, C_in, C_out, zero_W=False)
    z_ref = non_local_block_ref(x, params_nz)
    z_exact = jax.block_until_ready(non_local_block(x, params_nz, fast=False))
    assert jnp.allclose(z_exact, z_ref, atol=1e-4, rtol=1e-4)
    z_exact_q = jax.block_until_ready(non_local_block(x, params_nz, fast=False, tq=128))
    assert jnp.allclose(z_exact_q, z_ref, atol=1e-4, rtol=1e-4)

    # 3) Fast mode (bf16 MXU inputs, f32 accumulation, approx reciprocal,
    #    deferred softmax normalization): relaxed tolerance vs f32 reference.
    z_fast = jax.block_until_ready(non_local_block(x, params_nz, fast=True))
    assert jnp.allclose(z_fast, z_ref, atol=8e-2, rtol=8e-2)

    print("KERNEL_OK")
</pallas_src>

<mosaic_0001>
module attributes {stable_mosaic.version = 11 : i64} {
  func.func @_nonlocal_kernel(%arg0: i32, %arg1: i32, %arg2: memref<1x4x256xf32, #tpu.memory_space<vmem>>, %arg3: memref<1x4x256xf32, #tpu.memory_space<vmem>>, %arg4: memref<8x4xf32, #tpu.memory_space<vmem>>, %arg5: memref<8x1xf32, #tpu.memory_space<vmem>>, %arg6: memref<17x4xf32, #tpu.memory_space<vmem>>, %arg7: memref<17x1xf32, #tpu.memory_space<vmem>>, %arg8: memref<4x8xf32, #tpu.memory_space<vmem>>, %arg9: memref<4x1xf32, #tpu.memory_space<vmem>>, %arg10: memref<1x4x256xf32, #tpu.memory_space<vmem>>) attributes {dimension_semantics = [#tpu.dimension_semantics<parallel>, #tpu.dimension_semantics<parallel>], iteration_bounds = array<i64: 2, 1>, scalar_prefetch = 0 : i64, scratch_operands = 0 : i64, tpu.core_type = #tpu.core_type<tc>, window_params = [{transform_indices = @transform_0, window_bounds = array<i64: 1, 4, 256>}, {transform_indices = @transform_1, window_bounds = array<i64: 1, 4, 256>}, {pipeline_mode = #tpu.pipeline_mode<synchronous>, transform_indices = @transform_2, window_bounds = array<i64: 8, 4>}, {pipeline_mode = #tpu.pipeline_mode<synchronous>, transform_indices = @transform_3, window_bounds = array<i64: 8, 1>}, {pipeline_mode = #tpu.pipeline_mode<synchronous>, transform_indices = @transform_4, window_bounds = array<i64: 17, 4>}, {pipeline_mode = #tpu.pipeline_mode<synchronous>, transform_indices = @transform_5, window_bounds = array<i64: 17, 1>}, {pipeline_mode = #tpu.pipeline_mode<synchronous>, transform_indices = @transform_6, window_bounds = array<i64: 4, 8>}, {pipeline_mode = #tpu.pipeline_mode<synchronous>, transform_indices = @transform_7, window_bounds = array<i64: 4, 1>}, {transform_indices = @transform_8, window_bounds = array<i64: 1, 4, 256>}]} {
    %c0 = arith.constant 0 : index
    %c0_0 = arith.constant 0 : index
    %c0_1 = arith.constant 0 : index
    %0 = vector.load %arg2[%c0, %c0_0, %c0_1] : memref<1x4x256xf32, #tpu.memory_space<vmem>>, vector<1x4x256xf32>
    %1 = vector.shape_cast %0 : vector<1x4x256xf32> to vector<4x256xf32>
    %c0_2 = arith.constant 0 : index
    %c0_3 = arith.constant 0 : index
    %c0_4 = arith.constant 0 : index
    %2 = vector.load %arg3[%c0_2, %c0_3, %c0_4] : memref<1x4x256xf32, #tpu.memory_space<vmem>>, vector<1x4x256xf32>
    %3 = vector.shape_cast %2 : vector<1x4x256xf32> to vector<4x256xf32>
    %c0_5 = arith.constant 0 : index
    %c0_6 = arith.constant 0 : index
    %4 = vector.load %arg6[%c0_5, %c0_6] : memref<17x4xf32, #tpu.memory_space<vmem>>, vector<17x4xf32>
    %cst = arith.constant dense<0.000000e+00> : vector<17x256xf32>
    %5 = tpu.matmul %4, %1, %cst {dimension_numbers = #tpu.dot_dimension_numbers<[1], [0], [0], [1], [0, 0, 1, 1], [], []>} : vector<17x4xf32>, vector<4x256xf32>, vector<17x256xf32> -> vector<17x256xf32>
    %c0_7 = arith.constant 0 : index
    %c0_8 = arith.constant 0 : index
    %6 = vector.load %arg7[%c0_7, %c0_8] : memref<17x1xf32, #tpu.memory_space<vmem>>, vector<17x1xf32>
    %7 = vector.broadcast %6 : vector<17x1xf32> to vector<17x256xf32>
    %8 = arith.addf %5, %7 : vector<17x256xf32>
    %9 = vector.extract_strided_slice %8 {offsets = [0, 0], sizes = [8, 256], strides = [1, 1]} : vector<17x256xf32> to vector<8x256xf32>
    %10 = vector.extract_strided_slice %8 {offsets = [8, 0], sizes = [9, 256], strides = [1, 1]} : vector<17x256xf32> to vector<9x256xf32>
    %c0_9 = arith.constant 0 : index
    %c0_10 = arith.constant 0 : index
    %11 = vector.load %arg4[%c0_9, %c0_10] : memref<8x4xf32, #tpu.memory_space<vmem>>, vector<8x4xf32>
    %cst_11 = arith.constant dense<0.000000e+00> : vector<8x256xf32>
    %12 = tpu.matmul %11, %3, %cst_11 {dimension_numbers = #tpu.dot_dimension_numbers<[1], [0], [0], [1], [0, 0, 1, 1], [], []>} : vector<8x4xf32>, vector<4x256xf32>, vector<8x256xf32> -> vector<8x256xf32>
    %c0_12 = arith.constant 0 : index
    %c0_13 = arith.constant 0 : index
    %13 = vector.load %arg5[%c0_12, %c0_13] : memref<8x1xf32, #tpu.memory_space<vmem>>, vector<8x1xf32>
    %14 = vector.broadcast %13 : vector<8x1xf32> to vector<8x256xf32>
    %15 = arith.addf %12, %14 : vector<8x256xf32>
    %16 = arith.truncf %15 : vector<8x256xf32> to vector<8x256xbf16>
    %17 = arith.truncf %9 : vector<8x256xf32> to vector<8x256xbf16>
    %cst_14 = arith.constant dense<0.000000e+00> : vector<256x256xf32>
    %18 = tpu.matmul %16, %17, %cst_14 {dimension_numbers = #tpu.dot_dimension_numbers<[0], [0], [1], [1], [0, 1, 1, 1], [], []>} : vector<8x256xbf16>, vector<8x256xbf16>, vector<256x256xf32> -> vector<256x256xf32>
    %cst_15 = arith.constant dense<0xFF800000> : vector<256xf32>
    %19 = vector.multi_reduction <maximumf>, %18, %cst_15 [1] : vector<256x256xf32> to vector<256xf32>
    %20 = vector.shape_cast %19 : vector<256xf32> to vector<256x1xf32>
    %21 = vector.broadcast %20 : vector<256x1xf32> to vector<256x256xf32>
    %22 = arith.subf %18, %21 : vector<256x256xf32>
    %23 = math.exp %22 : vector<256x256xf32>
    %24 = arith.truncf %10 : vector<9x256xf32> to vector<9x256xbf16>
    %25 = arith.truncf %23 : vector<256x256xf32> to vector<256x256xbf16>
    %cst_16 = arith.constant dense<0.000000e+00> : vector<9x256xf32>
    %26 = tpu.matmul %24, %25, %cst_16 {dimension_numbers = #tpu.dot_dimension_numbers<[1], [1], [0], [0], [0, 0, 1, 0], [], []>} : vector<9x256xbf16>, vector<256x256xbf16>, vector<9x256xf32> -> vector<9x256xf32>
    %27 = vector.extract_strided_slice %26 {offsets = [8, 0], sizes = [1, 256], strides = [1, 1]} : vector<9x256xf32> to vector<1x256xf32>
    %28 = vector.extract_strided_slice %26 {offsets = [0, 0], sizes = [8, 256], strides = [1, 1]} : vector<9x256xf32> to vector<8x256xf32>
    %29 = tpu.reciprocal %27 {approx = true} : vector<1x256xf32> -> vector<1x256xf32>
    %30 = vector.broadcast %29 : vector<1x256xf32> to vector<8x256xf32>
    %31 = arith.mulf %28, %30 : vector<8x256xf32>
    %c0_17 = arith.constant 0 : index
    %c0_18 = arith.constant 0 : index
    %32 = vector.load %arg8[%c0_17, %c0_18] : memref<4x8xf32, #tpu.memory_space<vmem>>, vector<4x8xf32>
    %cst_19 = arith.constant dense<0.000000e+00> : vector<4x256xf32>
    %33 = tpu.matmul %32, %31, %cst_19 {dimension_numbers = #tpu.dot_dimension_numbers<[1], [0], [0], [1], [0, 0, 1, 1], [], []>} : vector<4x8xf32>, vector<8x256xf32>, vector<4x256xf32> -> vector<4x256xf32>
    %c0_20 = arith.constant 0 : index
    %c0_21 = arith.constant 0 : index
    %34 = vector.load %arg9[%c0_20, %c0_21] : memref<4x1xf32, #tpu.memory_space<vmem>>, vector<4x1xf32>
    %35 = vector.broadcast %34 : vector<4x1xf32> to vector<4x256xf32>
    %36 = arith.addf %33, %35 : vector<4x256xf32>
    %37 = arith.addf %36, %3 : vector<4x256xf32>
    %c0_22 = arith.constant 0 : index
    %c0_23 = arith.constant 0 : index
    %c0_24 = arith.constant 0 : index
    %38 = vector.load %arg10[%c0_22, %c0_23, %c0_24] : memref<1x4x256xf32, #tpu.memory_space<vmem>>, vector<1x4x256xf32>
    %39 = vector.shape_cast %38 : vector<1x4x256xf32> to vector<4x256xf32>
    %40 = vector.shape_cast %37 : vector<4x256xf32> to vector<1x4x256xf32>
    tpu.vector_store %arg10[%c0_22, %c0_23, %c0_24], %40 {strides = array<i32>} : memref<1x4x256xf32, #tpu.memory_space<vmem>>, vector<1x4x256xf32>,
    return
  }
  func.func @transform_0(%arg0: i32, %arg1: i32) -> (i32, i32, i32) {
    %c0_i32 = arith.constant 0 : i32
    %c0_i32_0 = arith.constant 0 : i32
    %c0_i32_1 = arith.constant 0 : i32
    return %arg0, %c0_i32, %c0_i32_0 : i32, i32, i32
  }
  func.func @transform_1(%arg0: i32, %arg1: i32) -> (i32, i32, i32) {
    %c0_i32 = arith.constant 0 : i32
    %c0_i32_0 = arith.constant 0 : i32
    return %arg0, %c0_i32, %arg1 : i32, i32, i32
  }
  func.func @transform_2(%arg0: i32, %arg1: i32) -> (i32, i32) {
    %c0_i32 = arith.constant 0 : i32
    %c0_i32_0 = arith.constant 0 : i32
    %c0_i32_1 = arith.constant 0 : i32
    return %c0_i32, %c0_i32_0 : i32, i32
  }
  func.func @transform_3(%arg0: i32, %arg1: i32) -> (i32, i32) {
    %c0_i32 = arith.constant 0 : i32
    %c0_i32_0 = arith.constant 0 : i32
    %c0_i32_1 = arith.constant 0 : i32
    return %c0_i32, %c0_i32_0 : i32, i32
  }
  func.func @transform_4(%arg0: i32, %arg1: i32) -> (i32, i32) {
    %c0_i32 = arith.constant 0 : i32
    %c0_i32_0 = arith.constant 0 : i32
    %c0_i32_1 = arith.constant 0 : i32
    return %c0_i32, %c0_i32_0 : i32, i32
  }
  func.func @transform_5(%arg0: i32, %arg1: i32) -> (i32, i32) {
    %c0_i32 = arith.constant 0 : i32
    %c0_i32_0 = arith.constant 0 : i32
    %c0_i32_1 = arith.constant 0 : i32
    return %c0_i32, %c0_i32_0 : i32, i32
  }
  func.func @transform_6(%arg0: i32, %arg1: i32) -> (i32, i32) {
    %c0_i32 = arith.constant 0 : i32
    %c0_i32_0 = arith.constant 0 : i32
    %c0_i32_1 = arith.constant 0 : i32
    return %c0_i32, %c0_i32_0 : i32, i32
  }
  func.func @transform_7(%arg0: i32, %arg1: i32) -> (i32, i32) {
    %c0_i32 = arith.constant 0 : i32
    %c0_i32_0 = arith.constant 0 : i32
    %c0_i32_1 = arith.constant 0 : i32
    return %c0_i32, %c0_i32_0 : i32, i32
  }
  func.func @transform_8(%arg0: i32, %arg1: i32) -> (i32, i32, i32) {
    %c0_i32 = arith.constant 0 : i32
    %c0_i32_0 = arith.constant 0 : i32
    return %arg0, %c0_i32, %arg1 : i32, i32, i32
  }
}

</mosaic_0001>

<llo_original>
// kernel: tpu_custom_call.1
$region0: #{tpu_custom_call.1}
  #allocation0 [shape = 'u32[]', space=smem, size = 0x4, offset = 0x4, fixed_abs, tag = 'smem constant byte address 0x4 - core index']
  #allocation1 [shape = 'u32[144,128]{1,0:T(1,128)}', space=vmem, size = 0x12000, scoped, tag = 'internal scratch']
  %s0 = inlined_call_operand.vmem [shape: f32[2,4,256], index: 0, kind: input, shape index: {}]
  %s1 = inlined_call_operand.vmem [shape: f32[2,4,256], index: 1, kind: input, shape index: {}]
  %s2 = inlined_call_operand.vmem [shape: f32[8,4], index: 2, kind: input, shape index: {}]
  %s3 = inlined_call_operand.vmem [shape: f32[8,1], index: 3, kind: input, shape index: {}]
  %s4 = inlined_call_operand.vmem [shape: f32[17,4], index: 4, kind: input, shape index: {}]
  %s5 = inlined_call_operand.vmem [shape: f32[17,1], index: 5, kind: input, shape index: {}]
  %s6 = inlined_call_operand.vmem [shape: f32[4,8], index: 6, kind: input, shape index: {}]
  %s7 = inlined_call_operand.vmem [shape: f32[4,1], index: 7, kind: input, shape index: {}]
  %s8 = inlined_call_operand.hbm [shape: f32[2,4,256], index: 8, kind: output, shape index: {}]
  %s9 = sld [smem:[#allocation0]]
  $region65: #{tpu_custom_call.1} parent=0
    _
  %s11 = ssub.s32 1, %s9
  %s12 = scalar_select 0, %s11, %s9
  $region1: #{tpu_custom_call.1} parent=0
    #allocation2 [shape = 'u8[8192]{0}', space=vmem, size = 0x2000, scoped, tag = 'output window, operand 0']
    #allocation3 [shape = 's32[2]{0}', space=sflag, size = 0x8, scoped, tag = 'scoped memory for tpu_custom_call.1']
    %13 = vsyncpa [#allocation3], 0
    %s14 = scalar_lea.sflag [#allocation3], 1
    %15 = vsyncpa %s14, 0
    loop: start=0, step=1, limit=4
    $region2: #{tpu_custom_call.1} parent=1 // loop_pre_header
      _
    $region3: #{tpu_custom_call.1} parent=1 // loop_header
      %s17 = sphi 0, %s21
      %p18 = scmp.ge.s32.totalorder %s17, 4
      %s24 = sphi 0, %s36
      %s25 = sphi 0, %s32
      %s26 = sphi 0, %s24
      %s27 = sphi 0, %s25
      %s28 = sphi 0, %s26
      %s29 = sphi 0, %s27
      %s39 = sphi 0, %s41
      %s42 = sphi 0, %s39
      %s43 = sphi 0, %s42
      %s59 = sphi 0, %s43
      %s67 = sphi 0, %s69
      %s70 = sphi 0, %s67
      %s71 = sphi 0, %s70
      %s87 = sphi 0, %s71
      %s91 = sphi 0, %s91
      %s93 = sphi 0, %s91
      %s94 = sphi 0, %s93
      %s108 = sphi 0, %s94
      %s112 = sphi 0, %s112
      %s114 = sphi 0, %s112
      %s115 = sphi 0, %s114
      %s129 = sphi 0, %s115
      %s133 = sphi 0, %s133
      %s135 = sphi 0, %s133
      %s136 = sphi 0, %s135
      %s150 = sphi 0, %s136
      %s154 = sphi 0, %s154
      %s156 = sphi 0, %s154
      %s157 = sphi 0, %s156
      %s171 = sphi 0, %s157
      %s175 = sphi 0, %s175
      %s177 = sphi 0, %s175
      %s178 = sphi 0, %s177
      %s192 = sphi 0, %s178
      %s196 = sphi 0, %s196
      %s198 = sphi 0, %s196
      %s199 = sphi 0, %s198
      %s213 = sphi 0, %s199
      %s221 = sphi 0, %s223
      %s224 = sphi 0, %s221
      %s225 = sphi 0, %s224
      %s241 = sphi 0, %s225
    $region4: #{tpu_custom_call.1} parent=1 // loop_header_branch
      %20 = sbr.rel (%p18) target = $region8
    $region5: #{tpu_custom_call.1} parent=1 // loop_body
      %s22 = ssub.s32 %s17, 1
      %s23 = ssub.s32 %s17, 2
      %s30 = sadd.s32 1, %s25
      %p31 = scmp.ge.s32.totalorder %s30, 1
      %s32 = scalar_select %p31, 0, %s30
      %s33 = sadd.s32 1, %s24
      %s34 = scalar_select %p31, %s33, %s24
      %p35 = scmp.ge.s32.totalorder %s34, 2
      %s36 = scalar_select %p35, 0, %s34
      %s37 = ssub.s32 %s24, %s36
      %p38 = scmp.eq.s32.totalorder %s37, 0
      %s40 = sadd.s32 %s39, 1
      %s41 = scalar_select %p38, %s39, %s40
      %p44 = pneg %p38
      %p45 = scmp.eq.s32.totalorder %s17, 1
      %p46 = por %p44, %p45
      %p47 = scmp.ne.s32.totalorder %s39, %s42
      %p48 = scmp.eq.s32.totalorder %s17, 0
      %p49 = por %p47, %p48
      %p50 = scmp.ne.s32.totalorder %s39, %s42
      %p51 = scmp.eq.s32.totalorder %s22, 1
      %p52 = por %p50, %p51
      %p53 = scmp.ne.s32.totalorder %s42, %s43
      %p54 = scmp.eq.s32.totalorder %s22, 0
      %p55 = por %p53, %p54
      %p56 = scmp.ne.s32.totalorder %s42, %s43
      %p57 = scmp.eq.s32.totalorder %s23, 1
      %p58 = por %p56, %p57
      %p60 = scmp.ne.s32.totalorder %s43, %s59
      %p61 = scmp.eq.s32.totalorder %s23, 0
      %p62 = por %p60, %p61
      %s63 = ssub.s32 %s24, %s36
      %s64 = ssub.s32 %s25, %s32
      %s65 = sor.u32 %s63, %s64
      %p66 = scmp.eq.s32.totalorder %s65, 0
      %s68 = sadd.s32 %s67, 1
      %s69 = scalar_select %p66, %s67, %s68
      %p72 = pneg %p66
      %p73 = scmp.eq.s32.totalorder %s17, 1
      %p74 = por %p72, %p73
      %p75 = scmp.ne.s32.totalorder %s67, %s70
      %p76 = scmp.eq.s32.totalorder %s17, 0
      %p77 = por %p75, %p76
      %p78 = scmp.ne.s32.totalorder %s67, %s70
      %p79 = scmp.eq.s32.totalorder %s22, 1
      %p80 = por %p78, %p79
      %p81 = scmp.ne.s32.totalorder %s70, %s71
      %p82 = scmp.eq.s32.totalorder %s22, 0
      %p83 = por %p81, %p82
      %p84 = scmp.ne.s32.totalorder %s70, %s71
      %p85 = scmp.eq.s32.totalorder %s23, 1
      %p86 = por %p84, %p85
      %p88 = scmp.ne.s32.totalorder %s71, %s87
      %p89 = scmp.eq.s32.totalorder %s23, 0
      %p90 = por %p88, %p89
      %s92 = sadd.s32 %s91, 1
      %p95 = scmp.eq.s32.totalorder %s17, 1
      %p96 = scmp.ne.s32.totalorder %s91, %s93
      %p97 = scmp.eq.s32.totalorder %s17, 0
      %p98 = por %p96, %p97
      %p99 = scmp.ne.s32.totalorder %s91, %s93
      %p100 = scmp.eq.s32.totalorder %s22, 1
      %p101 = por %p99, %p100
      %p102 = scmp.ne.s32.totalorder %s93, %s94
      %p103 = scmp.eq.s32.totalorder %s22, 0
      %p104 = por %p102, %p103
      %p105 = scmp.ne.s32.totalorder %s93, %s94
      %p106 = scmp.eq.s32.totalorder %s23, 1
      %p107 = por %p105, %p106
      %p109 = scmp.ne.s32.totalorder %s94, %s108
      %p110 = scmp.eq.s32.totalorder %s23, 0
      %p111 = por %p109, %p110
      %s113 = sadd.s32 %s112, 1
      %p116 = scmp.eq.s32.totalorder %s17, 1
      %p117 = scmp.ne.s32.totalorder %s112, %s114
      %p118 = scmp.eq.s32.totalorder %s17, 0
      %p119 = por %p117, %p118
      %p120 = scmp.ne.s32.totalorder %s112, %s114
      %p121 = scmp.eq.s32.totalorder %s22, 1
      %p122 = por %p120, %p121
      %p123 = scmp.ne.s32.totalorder %s114, %s115
      %p124 = scmp.eq.s32.totalorder %s22, 0
      %p125 = por %p123, %p124
      %p126 = scmp.ne.s32.totalorder %s114, %s115
      %p127 = scmp.eq.s32.totalorder %s23, 1
      %p128 = por %p126, %p127
      %p130 = scmp.ne.s32.totalorder %s115, %s129
      %p131 = scmp.eq.s32.totalorder %s23, 0
      %p132 = por %p130, %p131
      %s134 = sadd.s32 %s133, 1
      %p137 = scmp.eq.s32.totalorder %s17, 1
      %p138 = scmp.ne.s32.totalorder %s133, %s135
      %p139 = scmp.eq.s32.totalorder %s17, 0
      %p140 = por %p138, %p139
      %p141 = scmp.ne.s32.totalorder %s133, %s135
      %p142 = scmp.eq.s32.totalorder %s22, 1
      %p143 = por %p141, %p142
      %p144 = scmp.ne.s32.totalorder %s135, %s136
      %p145 = scmp.eq.s32.totalorder %s22, 0
      %p146 = por %p144, %p145
      %p147 = scmp.ne.s32.totalorder %s135, %s136
      %p148 = scmp.eq.s32.totalorder %s23, 1
      %p149 = por %p147, %p148
      %p151 = scmp.ne.s32.totalorder %s136, %s150
      %p152 = scmp.eq.s32.totalorder %s23, 0
      %p153 = por %p151, %p152
      %s155 = sadd.s32 %s154, 1
      %p158 = scmp.eq.s32.totalorder %s17, 1
      %p159 = scmp.ne.s32.totalorder %s154, %s156
      %p160 = scmp.eq.s32.totalorder %s17, 0
      %p161 = por %p159, %p160
      %p162 = scmp.ne.s32.totalorder %s154, %s156
      %p163 = scmp.eq.s32.totalorder %s22, 1
      %p164 = por %p162, %p163
      %p165 = scmp.ne.s32.totalorder %s156, %s157
      %p166 = scmp.eq.s32.totalorder %s22, 0
      %p167 = por %p165, %p166
      %p168 = scmp.ne.s32.totalorder %s156, %s157
      %p169 = scmp.eq.s32.totalorder %s23, 1
      %p170 = por %p168, %p169
      %p172 = scmp.ne.s32.totalorder %s157, %s171
      %p173 = scmp.eq.s32.totalorder %s23, 0
      %p174 = por %p172, %p173
      %s176 = sadd.s32 %s175, 1
      %p179 = scmp.eq.s32.totalorder %s17, 1
      %p180 = scmp.ne.s32.totalorder %s175, %s177
      %p181 = scmp.eq.s32.totalorder %s17, 0
      %p182 = por %p180, %p181
      %p183 = scmp.ne.s32.totalorder %s175, %s177
      %p184 = scmp.eq.s32.totalorder %s22, 1
      %p185 = por %p183, %p184
      %p186 = scmp.ne.s32.totalorder %s177, %s178
      %p187 = scmp.eq.s32.totalorder %s22, 0
      %p188 = por %p186, %p187
      %p189 = scmp.ne.s32.totalorder %s177, %s178
      %p190 = scmp.eq.s32.totalorder %s23, 1
      %p191 = por %p189, %p190
      %p193 = scmp.ne.s32.totalorder %s178, %s192
      %p194 = scmp.eq.s32.totalorder %s23, 0
      %p195 = por %p193, %p194
      %s197 = sadd.s32 %s196, 1
      %p200 = scmp.eq.s32.totalorder %s17, 1
      %p201 = scmp.ne.s32.totalorder %s196, %s198
      %p202 = scmp.eq.s32.totalorder %s17, 0
      %p203 = por %p201, %p202
      %p204 = scmp.ne.s32.totalorder %s196, %s198
      %p205 = scmp.eq.s32.totalorder %s22, 1
      %p206 = por %p204, %p205
      %p207 = scmp.ne.s32.totalorder %s198, %s199
      %p208 = scmp.eq.s32.totalorder %s22, 0
      %p209 = por %p207, %p208
      %p210 = scmp.ne.s32.totalorder %s198, %s199
      %p211 = scmp.eq.s32.totalorder %s23, 1
      %p212 = por %p210, %p211
      %p214 = scmp.ne.s32.totalorder %s199, %s213
      %p215 = scmp.eq.s32.totalorder %s23, 0
      %p216 = por %p214, %p215
      %s217 = ssub.s32 %s24, %s36
      %s218 = ssub.s32 %s25, %s32
      %s219 = sor.u32 %s217, %s218
      %p220 = scmp.eq.s32.totalorder %s219, 0
      %s222 = sadd.s32 %s221, 1
      %s223 = scalar_select %p220, %s221, %s222
      %p226 = pneg %p220
      %p227 = scmp.eq.s32.totalorder %s17, 1
      %p228 = por %p226, %p227
      %p229 = scmp.ne.s32.totalorder %s221, %s224
      %p230 = scmp.eq.s32.totalorder %s17, 0
      %p231 = por %p229, %p230
      %p232 = scmp.ne.s32.totalorder %s221, %s224
      %p233 = scmp.eq.s32.totalorder %s22, 1
      %p234 = por %p232, %p233
      %p235 = scmp.ne.s32.totalorder %s224, %s225
      %p236 = scmp.eq.s32.totalorder %s22, 0
      %p237 = por %p235, %p236
      %p238 = scmp.ne.s32.totalorder %s224, %s225
      %p239 = scmp.eq.s32.totalorder %s23, 1
      %p240 = por %p238, %p239
      %p242 = scmp.ne.s32.totalorder %s225, %s241
      %p243 = scmp.eq.s32.totalorder %s23, 0
      %p244 = por %p242, %p243
      %p245 = scmp.le.s32.totalorder 1, %s17
      %p246 = scmp.lt.s32.totalorder %s17, 3
      %p247 = pnand %p245, %p246
      %p248 = pneg %p247
      // Predicated region
      $region9: #{tpu_custom_call.1} parent=5 // pred_check
        _
      $region10: #{tpu_custom_call.1} parent=5 // pred_check_branch
        %250 = sbr.rel (%p247) target = $region12
      $region11: #{tpu_custom_call.1} parent=5 // pred_region
        %s251 = ssub.s32 %s17, 1
        // Predicated region
        $region13: #{tpu_custom_call.1} parent=11 // pred_check
          %p252 = pneg %p104
        $region14: #{tpu_custom_call.1} parent=11 // pred_check_branch
          %254 = sbr.rel (%p252) target = $region16
        $region15: #{tpu_custom_call.1} parent=11 // pred_region
          _
        $region16: #{tpu_custom_call.1} parent=11 // pred_fallthru
          _
        // Predicated region
        $region17: #{tpu_custom_call.1} parent=11 // pred_check
          %p255 = pneg %p125
        $region18: #{tpu_custom_call.1} parent=11 // pred_check_branch
          %257 = sbr.rel (%p255) target = $region20
        $region19: #{tpu_custom_call.1} parent=11 // pred_region
          _
        $region20: #{tpu_custom_call.1} parent=11 // pred_fallthru
          _
        // Predicated region
        $region21: #{tpu_custom_call.1} parent=11 // pred_check
          %p258 = pneg %p146
        $region22: #{tpu_custom_call.1} parent=11 // pred_check_branch
          %260 = sbr.rel (%p258) target = $region24
        $region23: #{tpu_custom_call.1} parent=11 // pred_region
          _
        $region24: #{tpu_custom_call.1} parent=11 // pred_fallthru
          _
        // Predicated region
        $region25: #{tpu_custom_call.1} parent=11 // pred_check
          %p261 = pneg %p167
        $region26: #{tpu_custom_call.1} parent=11 // pred_check_branch
          %263 = sbr.rel (%p261) target = $region28
        $region27: #{tpu_custom_call.1} parent=11 // pred_region
          _
        $region28: #{tpu_custom_call.1} parent=11 // pred_fallthru
          _
        // Predicated region
        $region29: #{tpu_custom_call.1} parent=11 // pred_check
          %p264 = pneg %p188
        $region30: #{tpu_custom_call.1} parent=11 // pred_check_branch
          %266 = sbr.rel (%p264) target = $region32
        $region31: #{tpu_custom_call.1} parent=11 // pred_region
          _
        $region32: #{tpu_custom_call.1} parent=11 // pred_fallthru
          _
        // Predicated region
        $region33: #{tpu_custom_call.1} parent=11 // pred_check
          %p267 = pneg %p209
        $region34: #{tpu_custom_call.1} parent=11 // pred_check_branch
          %269 = sbr.rel (%p267) target = $region36
        $region35: #{tpu_custom_call.1} parent=11 // pred_region
          _
        $region36: #{tpu_custom_call.1} parent=11 // pred_fallthru
          _
      $region12: #{tpu_custom_call.1} parent=5 // pred_fallthru
        _
      %p270 = scmp.lt.s32.totalorder %s17, 2
      // Predicated region
      $region37: #{tpu_custom_call.1} parent=5 // pred_check
        %p271 = pneg %p270
      $region38: #{tpu_custom_call.1} parent=5 // pred_check_branch
        %273 = sbr.rel (%p271) target = $region40
      $region39: #{tpu_custom_call.1} parent=5 // pred_region
        // Predicated region
        $region41: #{tpu_custom_call.1} parent=39 // pred_check
          %p274 = pneg %p49
        $region42: #{tpu_custom_call.1} parent=39 // pred_check_branch
          %276 = sbr.rel (%p274) target = $region44
        $region43: #{tpu_custom_call.1} parent=39 // pred_region
          %p277 = scmp.lt.s32.totalorder %s24, 1
          %s278 = scalar_select %p277, %s24, 1
          %s279 = smul.addr %s278, 2
          %s280 = smul.addr %s279, 4
          %s281 = scalar_lea.vmem %s0, %s280
        $region44: #{tpu_custom_call.1} parent=39 // pred_fallthru
          _
        // Predicated region
        $region45: #{tpu_custom_call.1} parent=39 // pred_check
          %p282 = pneg %p77
        $region46: #{tpu_custom_call.1} parent=39 // pred_check_branch
          %284 = sbr.rel (%p282) target = $region48
        $region47: #{tpu_custom_call.1} parent=39 // pred_region
          %s285 = smul.u32 2, %s25
          %p286 = scmp.lt.s32.totalorder %s24, 1
          %s287 = scalar_select %p286, %s24, 1
          %p288 = scmp.lt.s32.totalorder %s285, 1
          %s289 = scalar_select %p288, %s285, 1
          %s290 = smul.addr %s287, 2
          %s291 = sadd.s32 %s289, %s290
          %s292 = smul.addr %s291, 4
          %s293 = scalar_lea.vmem %s1, %s292
          %s294 = smul.u32 2, %s25
        $region48: #{tpu_custom_call.1} parent=39 // pred_fallthru
          _
      $region40: #{tpu_custom_call.1} parent=5 // pred_fallthru
        _
      %p295 = scmp.le.s32.totalorder 1, %s17
      %p296 = scmp.lt.s32.totalorder %s17, 3
      %p297 = pnand %p295, %p296
      %p298 = pneg %p297
      // Predicated region
      $region49: #{tpu_custom_call.1} parent=5 // pred_check
        _
      $region50: #{tpu_custom_call.1} parent=5 // pred_check_branch
        %300 = sbr.rel (%p297) target = $region52
      $region51: #{tpu_custom_call.1} parent=5 // pred_region
        %s301 = ssub.s32 %s17, 1
        %p302 = scmp.lt.s32.totalorder %s26, 1
        %s303 = scalar_select %p302, %s26, 1
        %s304 = smul.addr %s303, 2
        %s305 = smul.addr %s304, 4
        %s306 = scalar_lea.vmem %s0, %s305
        %p307 = pneg %p55
        %p308 = pneg %p52
        %s309 = smul.u32 2, %s27
        %p310 = scmp.lt.s32.totalorder %s26, 1
        %s311 = scalar_select %p310, %s26, 1
        %p312 = scmp.lt.s32.totalorder %s309, 1
        %s313 = scalar_select %p312, %s309, 1
        %s314 = smul.addr %s311, 2
        %s315 = sadd.s32 %s313, %s314
        %s316 = smul.addr %s315, 4
        %s317 = scalar_lea.vmem %s1, %s316
        %p318 = pneg %p83
        %p319 = pneg %p80
        %p320 = pneg %p104
        %p321 = pneg %p101
        %p322 = pneg %p125
        %p323 = pneg %p122
        %p324 = pneg %p146
        %p325 = pneg %p143
        %p326 = pneg %p167
        %p327 = pneg %p164
        %p328 = pneg %p188
        %p329 = pneg %p185
        %p330 = pneg %p209
        %p331 = pneg %p206
        %p332 = pneg %p237
        %p333 = pneg %p234
        %s334 = sand.u32 %s224, 1
        %s335 = scalar_lea.sflag [#allocation3], %s334
        %s336 = sand.u32 %s224, 1
        %s337 = smul.addr %s336, 8
        %s338 = scalar_lea.vmem [#allocation2], %s337
        %p339 = scmp.lt.s32.totalorder %s26, 1
        %s340 = scalar_select %p339, %s26, 1
        %s341 = smul.addr %s340, 2
        %s342 = smul.addr %s341, 4
        %s343 = scalar_lea.vmem %s0, %s342
        %s344 = smul.u32 2, %s27
        %p345 = scmp.lt.s32.totalorder %s26, 1
        %s346 = scalar_select %p345, %s26, 1
        %p347 = scmp.lt.s32.totalorder %s344, 1
        %s348 = scalar_select %p347, %s344, 1
        %s349 = smul.addr %s346, 2
        %s350 = sadd.s32 %s348, %s349
        %s351 = smul.addr %s350, 4
        %s352 = scalar_lea.vmem %s1, %s351
        %s353 = smul.u32 2, %s27
        %s354 = smul.u32 2, %s27
        %v356 = vld [vmem:[%s343] sm:$0xff]
        %v357 = vld [vmem:[%s352] sm:$0xff]
        %v358 = vld [vmem:[%s4] sm:$0xff]
        %v359 = vld [vmem:[%s4 + $0x8] sm:$0xff]
        %v360 = vld [vmem:[%s4 + $0x10] sm:$0x1]
        %v361 = vld [vmem:[%s5] sm:$0xff]
        %v362 = vld [vmem:[%s5 + $0x8] sm:$0xff]
        %v363 = vld [vmem:[%s5 + $0x10] sm:$0x1]
        %365 = vset.pattern.permute.xlu0 0
        %366 = vperm.xlu0 %365, %v361
        %v367 = vpop.permute.xlu0 %366
        %370 = vset.pattern.permute.xlu0 0
        %371 = vperm.xlu0 %370, %v362
        %v372 = vpop.permute.xlu0 %371
        %375 = vset.pattern.permute.xlu0 0
        %376 = vperm.xlu0 %375, %v363
        %v377 = vpop.permute.xlu0 %376
        %v380 = vcombine.high %v356, %v356
        %vm381 = vcmask 31744
        %v383 = vsel %vm381, %v358, 0
        %v386 = vsel %vm381, %v359, 0
        %v389 = vsel %vm381, %v360, 0
        %vm391 = vcmask 1043456
        %v392 = vsel %vm391, %v356, 0
        %v394 = vsel %vm391, %v380, 0
        %396 = vmatprep.subr.mxu0 0.0
        %397 = vmatpush1.msra.mxu0 0.0
        %398 = vmatprep.subr.mxu0 0.0
        %399 = vmatpush1.msra.mxu0 0.0
        %400 = vmatprep.subr.mxu0 0.0
        %401 = vmatpush1.msra.mxu0 0.0
        %402 = vmatprep.subr.mxu0 0.0
        %403 = vmatpush1.msra.mxu0 0.0
        %404 = vmatprep.subr.mxu0 0.0
        %405 = vmatpush1.msra.mxu0 0.0
        %406 = vmatprep.subr.mxu0 0.0
        %407 = vmatpush1.msra.mxu0 0.0
        %408 = vmatprep.subr.mxu0 0.0
        %409 = vmatpush1.msra.mxu0 0.0
        %410 = vmatprep.subr.mxu0 0.0
        %411 = vmatpush1.msra.mxu0 0.0
        %412 = vmatprep.subr.mxu0 0.0
        %413 = vmatpush1.msra.mxu0 0.0
        %414 = vmatprep.subr.mxu0 0.0
        %415 = vmatpush1.msra.mxu0 0.0
        %416 = vmatprep.subr.mxu0 0.0
        %417 = vmatpush1.msra.mxu0 0.0
        %418 = vmatprep.subr.mxu0 0.0
        %419 = vmatpush1.msra.mxu0 0.0
        %420 = vmatprep.subr.mxu0 0.0
        %421 = vmatpush1.msra.mxu0 0.0
        %422 = vmatprep.subr.mxu0 0.0
        %423 = vmatpush1.msra.mxu0 0.0
        %424 = vmatprep.subr.mxu0 0.0
        %425 = vmatpush1.msra.mxu0 0.0
        %426 = vmatprep.subr.mxu0 %v394
        %427 = vmatpush1.msra.mxu0 %v392
        %428 = vmatprep.subr.mxu0 0.0
        %429 = vmatpush2.msra.mxu0 0.0
        %430 = vmatprep.subr.mxu0 0.0
        %431 = vmatpush2.msra.mxu0 0.0
        %432 = vmatprep.subr.mxu0 0.0
        %433 = vmatpush2.msra.mxu0 0.0
        %434 = vmatprep.subr.mxu0 0.0
        %435 = vmatpush2.msra.mxu0 0.0
        %436 = vmatprep.subr.mxu0 0.0
        %437 = vmatpush2.msra.mxu0 0.0
        %438 = vmatprep.subr.mxu0 0.0
        %439 = vmatpush2.msra.mxu0 0.0
        %440 = vmatprep.subr.mxu0 0.0
        %441 = vmatpush2.msra.mxu0 0.0
        %442 = vmatprep.subr.mxu0 0.0
        %443 = vmatpush2.msra.mxu0 0.0
        %444 = vmatprep.subr.mxu0 0.0
        %445 = vmatpush2.msra.mxu0 0.0
        %446 = vmatprep.subr.mxu0 0.0
        %447 = vmatpush2.msra.mxu0 0.0
        %448 = vmatprep.subr.mxu0 0.0
        %449 = vmatpush2.msra.mxu0 0.0
        %450 = vmatprep.subr.mxu0 0.0
        %451 = vmatpush2.msra.mxu0 0.0
        %452 = vmatprep.subr.mxu0 0.0
        %453 = vmatpush2.msra.mxu0 0.0
        %454 = vmatprep.subr.mxu0 0.0
        %455 = vmatpush2.msra.mxu0 0.0
        %456 = vmatprep.subr.mxu0 0.0
        %457 = vmatpush2.msra.mxu0 0.0
        %458 = vmatprep.subr.mxu0 0.0
        %459 = vmatpush2.msra.mxu0 0.0
        %460 = vmatprep.mubr.f32.mxu0 0.0
        %461 = vmatmul.mubr.f32.gmra.mxu0 %v383
        %v462 = vpop.f32.mrf.mxu0
        %v463 = vadd.f32 %v367, %v462
        %v464 = vpop.f32.mrf.mxu0
        %v465 = vadd.f32 %v367, %v464
        %466 = vmatprep.mubr.f32.mxu0 0.0
        %467 = vmatmul.mubr.f32.gmra.mxu0 %v386
        %v468 = vpop.f32.mrf.mxu0
        %v469 = vadd.f32 %v372, %v468
        %v470 = vpop.f32.mrf.mxu0
        %v471 = vadd.f32 %v372, %v470
        %472 = vmatprep.mubr.f32.mxu0 0.0
        %473 = vmatmul.mubr.f32.gmra.mxu0 %v389
        %v474 = vpop.f32.mrf.mxu0
        %v475 = vadd.f32 %v377, %v474
        %v476 = vpop.f32.mrf.mxu0
        %v477 = vadd.f32 %v377, %v476
        %478 = vdwg.mxu0
        %v479 = vld [vmem:[%s2] sm:$0xff]
        %v480 = vld [vmem:[%s3] sm:$0xff]
        %482 = vset.pattern.permute.xlu0 0
        %483 = vperm.xlu0 %482, %v480
        %v484 = vpop.permute.xlu0 %483
        %v487 = vcombine.high %v357, %v357
        %v489 = vsel %vm381, %v479, 0
        %v491 = vsel %vm391, %v357, 0
        %v493 = vsel %vm391, %v487, 0
        %495 = vmatprep.subr.mxu0 0.0
        %496 = vmatpush1.msra.mxu0 0.0
        %497 = vmatprep.subr.mxu0 0.0
        %498 = vmatpush1.msra.mxu0 0.0
        %499 = vmatprep.subr.mxu0 0.0
        %500 = vmatpush1.msra.mxu0 0.0
        %501 = vmatprep.subr.mxu0 0.0
        %502 = vmatpush1.msra.mxu0 0.0
        %503 = vmatprep.subr.mxu0 0.0
        %504 = vmatpush1.msra.mxu0 0.0
        %505 = vmatprep.subr.mxu0 0.0
        %506 = vmatpush1.msra.mxu0 0.0
        %507 = vmatprep.subr.mxu0 0.0
        %508 = vmatpush1.msra.mxu0 0.0
        %509 = vmatprep.subr.mxu0 0.0
        %510 = vmatpush1.msra.mxu0 0.0
        %511 = vmatprep.subr.mxu0 0.0
        %512 = vmatpush1.msra.mxu0 0.0
        %513 = vmatprep.subr.mxu0 0.0
        %514 = vmatpush1.msra.mxu0 0.0
        %515 = vmatprep.subr.mxu0 0.0
        %516 = vmatpush1.msra.mxu0 0.0
        %517 = vmatprep.subr.mxu0 0.0
        %518 = vmatpush1.msra.mxu0 0.0
        %519 = vmatprep.subr.mxu0 0.0
        %520 = vmatpush1.msra.mxu0 0.0
        %521 = vmatprep.subr.mxu0 0.0
        %522 = vmatpush1.msra.mxu0 0.0
        %523 = vmatprep.subr.mxu0 0.0
        %524 = vmatpush1.msra.mxu0 0.0
        %525 = vmatprep.subr.mxu0 %v493
        %526 = vmatpush1.msra.mxu0 %v491
        %527 = vmatprep.subr.mxu0 0.0
        %528 = vmatpush2.msra.mxu0 0.0
        %529 = vmatprep.subr.mxu0 0.0
        %530 = vmatpush2.msra.mxu0 0.0
        %531 = vmatprep.subr.mxu0 0.0
        %532 = vmatpush2.msra.mxu0 0.0
        %533 = vmatprep.subr.mxu0 0.0
        %534 = vmatpush2.msra.mxu0 0.0
        %535 = vmatprep.subr.mxu0 0.0
        %536 = vmatpush2.msra.mxu0 0.0
        %537 = vmatprep.subr.mxu0 0.0
        %538 = vmatpush2.msra.mxu0 0.0
        %539 = vmatprep.subr.mxu0 0.0
        %540 = vmatpush2.msra.mxu0 0.0
        %541 = vmatprep.subr.mxu0 0.0
        %542 = vmatpush2.msra.mxu0 0.0
        %543 = vmatprep.subr.mxu0 0.0
        %544 = vmatpush2.msra.mxu0 0.0
        %545 = vmatprep.subr.mxu0 0.0
        %546 = vmatpush2.msra.mxu0 0.0
        %547 = vmatprep.subr.mxu0 0.0
        %548 = vmatpush2.msra.mxu0 0.0
        %549 = vmatprep.subr.mxu0 0.0
        %550 = vmatpush2.msra.mxu0 0.0
        %551 = vmatprep.subr.mxu0 0.0
        %552 = vmatpush2.msra.mxu0 0.0
        %553 = vmatprep.subr.mxu0 0.0
        %554 = vmatpush2.msra.mxu0 0.0
        %555 = vmatprep.subr.mxu0 0.0
        %556 = vmatpush2.msra.mxu0 0.0
        %557 = vmatprep.subr.mxu0 0.0
        %558 = vmatpush2.msra.mxu0 0.0
        %559 = vmatprep.mubr.f32.mxu0 0.0
        %560 = vmatmul.mubr.f32.gmra.mxu0 %v489
        %v561 = vpop.f32.mrf.mxu0
        %v562 = vadd.f32 %v484, %v561
        %v563 = vpop.f32.mrf.mxu0
        %v564 = vadd.f32 %v484, %v563
        %565 = vdwg.mxu0
        %v566 = vpack.c.bf16 %v562, %v562
        %v567 = vpack.c.bf16 %v564, %v564
        %v568 = vpack.c.bf16 %v463, %v463
        %v569 = vpack.c.bf16 %v465, %v465
        %570 = vxpose.xlu0.c.b16.start [1/8] %v566, 128
        %571 = vxpose.xlu0.c.b16.cont [2/8] 0, 128
        %572 = vxpose.xlu0.c.b16.cont [3/8] 0, 128
        %573 = vxpose.xlu0.c.b16.cont [4/8] 0, 128
        %574 = vxpose.xlu0.c.b16.cont [5/8] 0, 128
        %575 = vxpose.xlu0.c.b16.cont [6/8] 0, 128
        %576 = vxpose.xlu0.c.b16.cont [7/8] 0, 128
        %577 = vxpose.xlu0.c.b16.end [8/8] 0, 128
        %v578 = vpop.trf.xlu0
        %v579 = vpop.trf.xlu0
        %v580 = vpop.trf.xlu0
        %v581 = vpop.trf.xlu0
        %v582 = vpop.trf.xlu0
        %v583 = vpop.trf.xlu0
        %v584 = vpop.trf.xlu0
        %v585 = vpop.trf.xlu0
        %586 = vxpose.xlu0.c.b16.start [1/8] %v567, 128
        %587 = vxpose.xlu0.c.b16.cont [2/8] 0, 128
        %588 = vxpose.xlu0.c.b16.cont [3/8] 0, 128
        %589 = vxpose.xlu0.c.b16.cont [4/8] 0, 128
        %590 = vxpose.xlu0.c.b16.cont [5/8] 0, 128
        %591 = vxpose.xlu0.c.b16.cont [6/8] 0, 128
        %592 = vxpose.xlu0.c.b16.cont [7/8] 0, 128
        %593 = vxpose.xlu0.c.b16.end [8/8] 0, 128
        %v594 = vpop.trf.xlu0
        %v595 = vpop.trf.xlu0
        %v596 = vpop.trf.xlu0
        %v597 = vpop.trf.xlu0
        %v598 = vpop.trf.xlu0
        %v599 = vpop.trf.xlu0
        %v600 = vpop.trf.xlu0
        %v601 = vpop.trf.xlu0
        %vm602 = vcmask 64512
        %v604 = vsel %vm602, %v578, 0
        %v607 = vsel %vm602, %v579, 0
        %v610 = vsel %vm602, %v580, 0
        %v613 = vsel %vm602, %v581, 0
        %v616 = vsel %vm602, %v582, 0
        %v619 = vsel %vm602, %v583, 0
        %v622 = vsel %vm602, %v584, 0
        %v625 = vsel %vm602, %v585, 0
        %v628 = vsel %vm602, %v594, 0
        %v631 = vsel %vm602, %v595, 0
        %v634 = vsel %vm602, %v596, 0
        %v637 = vsel %vm602, %v597, 0
        %v640 = vsel %vm602, %v598, 0
        %v643 = vsel %vm602, %v599, 0
        %v646 = vsel %vm602, %v600, 0
        %v649 = vsel %vm602, %v601, 0
        %v652 = vsel %vm391, %v568, 0
        %v655 = vsel %vm391, %v569, 0
        %657 = vmatprep.subr.bf16.mxu0 0
        %658 = vmatpush1.bf16.msra.mxu0 0
        %659 = vmatprep.subr.bf16.mxu0 0
        %660 = vmatpush1.bf16.msra.mxu0 0
        %661 = vmatprep.subr.bf16.mxu0 0
        %662 = vmatpush1.bf16.msra.mxu0 0
        %663 = vmatprep.subr.bf16.mxu0 0
        %664 = vmatpush1.bf16.msra.mxu0 0
        %665 = vmatprep.subr.bf16.mxu0 0
        %666 = vmatpush1.bf16.msra.mxu0 0
        %667 = vmatprep.subr.bf16.mxu0 0
        %668 = vmatpush1.bf16.msra.mxu0 0
        %669 = vmatprep.subr.bf16.mxu0 0
        %670 = vmatpush1.bf16.msra.mxu0 0
        %671 = vmatprep.subr.bf16.mxu0 %v655
        %672 = vmatpush1.bf16.msra.mxu0 %v652
        %673 = vmatprep.subr.bf16.mxu0 0
        %674 = vmatpush2.bf16.msra.mxu0 0
        %675 = vmatprep.subr.bf16.mxu0 0
        %676 = vmatpush2.bf16.msra.mxu0 0
        %677 = vmatprep.subr.bf16.mxu0 0
        %678 = vmatpush2.bf16.msra.mxu0 0
        %679 = vmatprep.subr.bf16.mxu0 0
        %680 = vmatpush2.bf16.msra.mxu0 0
        %681 = vmatprep.subr.bf16.mxu0 0
        %682 = vmatpush2.bf16.msra.mxu0 0
        %683 = vmatprep.subr.bf16.mxu0 0
        %684 = vmatpush2.bf16.msra.mxu0 0
        %685 = vmatprep.subr.bf16.mxu0 0
        %686 = vmatpush2.bf16.msra.mxu0 0
        %687 = vmatprep.subr.bf16.mxu0 0
        %688 = vmatpush2.bf16.msra.mxu0 0
        %689 = vmatprep.mubr.bf16.mxu0 0
        %690 = vmatmul.mubr.bf16.gmra.mxu0 %v604
        %v691 = vpop.f32.mrf.mxu0
        %v692 = vadd.f32 0.0, %v691
        %v693 = vpop.f32.mrf.mxu0
        %v694 = vadd.f32 0.0, %v693
        %v695 = vpop.f32.mrf.mxu0
        %v696 = vadd.f32 0.0, %v695
        %v697 = vpop.f32.mrf.mxu0
        %v698 = vadd.f32 0.0, %v697
        %699 = vmatprep.mubr.bf16.mxu0 0
        %700 = vmatmul.mubr.bf16.gmra.mxu0 %v607
        %v701 = vpop.f32.mrf.mxu0
        %v702 = vadd.f32 0.0, %v701
        %v703 = vpop.f32.mrf.mxu0
        %v704 = vadd.f32 0.0, %v703
        %v705 = vpop.f32.mrf.mxu0
        %v706 = vadd.f32 0.0, %v705
        %v707 = vpop.f32.mrf.mxu0
        %v708 = vadd.f32 0.0, %v707
        %709 = vmatprep.mubr.bf16.mxu0 0
        %710 = vmatmul.mubr.bf16.gmra.mxu0 %v610
        %v711 = vpop.f32.mrf.mxu0
        %v712 = vadd.f32 0.0, %v711
        %v713 = vpop.f32.mrf.mxu0
        %v714 = vadd.f32 0.0, %v713
        %v715 = vpop.f32.mrf.mxu0
        %v716 = vadd.f32 0.0, %v715
        %v717 = vpop.f32.mrf.mxu0
        %v718 = vadd.f32 0.0, %v717
        %719 = vmatprep.mubr.bf16.mxu0 0
        %720 = vmatmul.mubr.bf16.gmra.mxu0 %v613
        %v721 = vpop.f32.mrf.mxu0
        %v722 = vadd.f32 0.0, %v721
        %v723 = vpop.f32.mrf.mxu0
        %v724 = vadd.f32 0.0, %v723
        %v725 = vpop.f32.mrf.mxu0
        %v726 = vadd.f32 0.0, %v725
        %v727 = vpop.f32.mrf.mxu0
        %v728 = vadd.f32 0.0, %v727
        %729 = vmatprep.mubr.bf16.mxu0 0
        %730 = vmatmul.mubr.bf16.gmra.mxu0 %v616
        %v731 = vpop.f32.mrf.mxu0
        %v732 = vadd.f32 0.0, %v731
        %v733 = vpop.f32.mrf.mxu0
        %v734 = vadd.f32 0.0, %v733
        %v735 = vpop.f32.mrf.mxu0
        %v736 = vadd.f32 0.0, %v735
        %v737 = vpop.f32.mrf.mxu0
        %v738 = vadd.f32 0.0, %v737
        %739 = vmatprep.mubr.bf16.mxu0 0
        %740 = vmatmul.mubr.bf16.gmra.mxu0 %v619
        %v741 = vpop.f32.mrf.mxu0
        %v742 = vadd.f32 0.0, %v741
        %v743 = vpop.f32.mrf.mxu0
        %v744 = vadd.f32 0.0, %v743
        %v745 = vpop.f32.mrf.mxu0
        %v746 = vadd.f32 0.0, %v745
        %v747 = vpop.f32.mrf.mxu0
        %v748 = vadd.f32 0.0, %v747
        %749 = vmatprep.mubr.bf16.mxu0 0
        %750 = vmatmul.mubr.bf16.gmra.mxu0 %v622
        %v751 = vpop.f32.mrf.mxu0
        %v752 = vadd.f32 0.0, %v751
        %v753 = vpop.f32.mrf.mxu0
        %v754 = vadd.f32 0.0, %v753
        %v755 = vpop.f32.mrf.mxu0
        %v756 = vadd.f32 0.0, %v755
        %v757 = vpop.f32.mrf.mxu0
        %v758 = vadd.f32 0.0, %v757
        %759 = vmatprep.mubr.bf16.mxu0 0
        %760 = vmatmul.mubr.bf16.gmra.mxu0 %v625
        %v761 = vpop.f32.mrf.mxu0
        %v762 = vadd.f32 0.0, %v761
        %v763 = vpop.f32.mrf.mxu0
        %v764 = vadd.f32 0.0, %v763
        %v765 = vpop.f32.mrf.mxu0
        %v766 = vadd.f32 0.0, %v765
        %v767 = vpop.f32.mrf.mxu0
        %v768 = vadd.f32 0.0, %v767
        %769 = vmatprep.mubr.bf16.mxu0 0
        %770 = vmatmul.mubr.bf16.gmra.mxu0 %v628
        %v771 = vpop.f32.mrf.mxu0
        %v772 = vadd.f32 0.0, %v771
        %v773 = vpop.f32.mrf.mxu0
        %v774 = vadd.f32 0.0, %v773
        %v775 = vpop.f32.mrf.mxu0
        %v776 = vadd.f32 0.0, %v775
        %v777 = vpop.f32.mrf.mxu0
        %v778 = vadd.f32 0.0, %v777
        %779 = vmatprep.mubr.bf16.mxu0 0
        %780 = vmatmul.mubr.bf16.gmra.mxu0 %v631
        %v781 = vpop.f32.mrf.mxu0
        %v782 = vadd.f32 0.0, %v781
        %v783 = vpop.f32.mrf.mxu0
        %v784 = vadd.f32 0.0, %v783
        %v785 = vpop.f32.mrf.mxu0
        %v786 = vadd.f32 0.0, %v785
        %v787 = vpop.f32.mrf.mxu0
        %v788 = vadd.f32 0.0, %v787
        %789 = vmatprep.mubr.bf16.mxu0 0
        %790 = vmatmul.mubr.bf16.gmra.mxu0 %v634
        %v791 = vpop.f32.mrf.mxu0
        %v792 = vadd.f32 0.0, %v791
        %v793 = vpop.f32.mrf.mxu0
        %v794 = vadd.f32 0.0, %v793
        %v795 = vpop.f32.mrf.mxu0
        %v796 = vadd.f32 0.0, %v795
        %v797 = vpop.f32.mrf.mxu0
        %v798 = vadd.f32 0.0, %v797
        %799 = vmatprep.mubr.bf16.mxu0 0
        %800 = vmatmul.mubr.bf16.gmra.mxu0 %v637
        %v801 = vpop.f32.mrf.mxu0
        %v802 = vadd.f32 0.0, %v801
        %v803 = vpop.f32.mrf.mxu0
        %v804 = vadd.f32 0.0, %v803
        %v805 = vpop.f32.mrf.mxu0
        %v806 = vadd.f32 0.0, %v805
        %v807 = vpop.f32.mrf.mxu0
        %v808 = vadd.f32 0.0, %v807
        %809 = vmatprep.mubr.bf16.mxu0 0
        %810 = vmatmul.mubr.bf16.gmra.mxu0 %v640
        %v811 = vpop.f32.mrf.mxu0
        %v812 = vadd.f32 0.0, %v811
        %v813 = vpop.f32.mrf.mxu0
        %v814 = vadd.f32 0.0, %v813
        %v815 = vpop.f32.mrf.mxu0
        %v816 = vadd.f32 0.0, %v815
        %v817 = vpop.f32.mrf.mxu0
        %v818 = vadd.f32 0.0, %v817
        %819 = vmatprep.mubr.bf16.mxu0 0
        %820 = vmatmul.mubr.bf16.gmra.mxu0 %v643
        %v821 = vpop.f32.mrf.mxu0
        %v822 = vadd.f32 0.0, %v821
        %v823 = vpop.f32.mrf.mxu0
        %v824 = vadd.f32 0.0, %v823
        %v825 = vpop.f32.mrf.mxu0
        %v826 = vadd.f32 0.0, %v825
        %v827 = vpop.f32.mrf.mxu0
        %v828 = vadd.f32 0.0, %v827
        %829 = vmatprep.mubr.bf16.mxu0 0
        %830 = vmatmul.mubr.bf16.gmra.mxu0 %v646
        %v831 = vpop.f32.mrf.mxu0
        %v832 = vadd.f32 0.0, %v831
        %v833 = vpop.f32.mrf.mxu0
        %v834 = vadd.f32 0.0, %v833
        %v835 = vpop.f32.mrf.mxu0
        %v836 = vadd.f32 0.0, %v835
        %v837 = vpop.f32.mrf.mxu0
        %v838 = vadd.f32 0.0, %v837
        %839 = vmatprep.mubr.bf16.mxu0 0
        %840 = vmatmul.mubr.bf16.gmra.mxu0 %v649
        %v841 = vpop.f32.mrf.mxu0
        %v842 = vadd.f32 0.0, %v841
        %v843 = vpop.f32.mrf.mxu0
        %v844 = vadd.f32 0.0, %v843
        %v845 = vpop.f32.mrf.mxu0
        %v846 = vadd.f32 0.0, %v845
        %v847 = vpop.f32.mrf.mxu0
        %v848 = vadd.f32 0.0, %v847
        %849 = vdwg.mxu0
        %v850 = vmax.f32 %v692, %v694
        %851 = vmax.xlane.f32.xlu0 %v850
        %v852 = vpop.xlane.xlu0 %851
        %v853 = vmax.f32 %v696, %v698
        %854 = vmax.xlane.f32.xlu0 %v853
        %v855 = vpop.xlane.xlu0 %854
        %v856 = vmax.f32 %v702, %v704
        %857 = vmax.xlane.f32.xlu0 %v856
        %v858 = vpop.xlane.xlu0 %857
        %v859 = vmax.f32 %v706, %v708
        %860 = vmax.xlane.f32.xlu0 %v859
        %v861 = vpop.xlane.xlu0 %860
        %v862 = vmax.f32 %v712, %v714
        %863 = vmax.xlane.f32.xlu0 %v862
        %v864 = vpop.xlane.xlu0 %863
        %v865 = vmax.f32 %v716, %v718
        %866 = vmax.xlane.f32.xlu0 %v865
        %v867 = vpop.xlane.xlu0 %866
        %v868 = vmax.f32 %v722, %v724
        %869 = vmax.xlane.f32.xlu0 %v868
        %v870 = vpop.xlane.xlu0 %869
        %v871 = vmax.f32 %v726, %v728
        %872 = vmax.xlane.f32.xlu0 %v871
        %v873 = vpop.xlane.xlu0 %872
        %v874 = vmax.f32 %v732, %v734
        %875 = vmax.xlane.f32.xlu0 %v874
        %v876 = vpop.xlane.xlu0 %875
        %v877 = vmax.f32 %v736, %v738
        %878 = vmax.xlane.f32.xlu0 %v877
        %v879 = vpop.xlane.xlu0 %878
        %v880 = vmax.f32 %v742, %v744
        %881 = vmax.xlane.f32.xlu0 %v880
        %v882 = vpop.xlane.xlu0 %881
        %v883 = vmax.f32 %v746, %v748
        %884 = vmax.xlane.f32.xlu0 %v883
        %v885 = vpop.xlane.xlu0 %884
        %v886 = vmax.f32 %v752, %v754
        %887 = vmax.xlane.f32.xlu0 %v886
        %v888 = vpop.xlane.xlu0 %887
        %v889 = vmax.f32 %v756, %v758
        %890 = vmax.xlane.f32.xlu0 %v889
        %v891 = vpop.xlane.xlu0 %890
        %v892 = vmax.f32 %v762, %v764
        %893 = vmax.xlane.f32.xlu0 %v892
        %v894 = vpop.xlane.xlu0 %893
        %v895 = vmax.f32 %v766, %v768
        %896 = vmax.xlane.f32.xlu0 %v895
        %v897 = vpop.xlane.xlu0 %896
        %v898 = vmax.f32 %v772, %v774
        %899 = vmax.xlane.f32.xlu0 %v898
        %v900 = vpop.xlane.xlu0 %899
        %v901 = vmax.f32 %v776, %v778
        %902 = vmax.xlane.f32.xlu0 %v901
        %v903 = vpop.xlane.xlu0 %902
        %v904 = vmax.f32 %v782, %v784
        %905 = vmax.xlane.f32.xlu0 %v904
        %v906 = vpop.xlane.xlu0 %905
        %v907 = vmax.f32 %v786, %v788
        %908 = vmax.xlane.f32.xlu0 %v907
        %v909 = vpop.xlane.xlu0 %908
        %v910 = vmax.f32 %v792, %v794
        %911 = vmax.xlane.f32.xlu0 %v910
        %v912 = vpop.xlane.xlu0 %911
        %v913 = vmax.f32 %v796, %v798
        %914 = vmax.xlane.f32.xlu0 %v913
        %v915 = vpop.xlane.xlu0 %914
        %v916 = vmax.f32 %v802, %v804
        %917 = vmax.xlane.f32.xlu0 %v916
        %v918 = vpop.xlane.xlu0 %917
        %v919 = vmax.f32 %v806, %v808
        %920 = vmax.xlane.f32.xlu0 %v919
        %v921 = vpop.xlane.xlu0 %920
        %v922 = vmax.f32 %v812, %v814
        %923 = vmax.xlane.f32.xlu0 %v922
        %v924 = vpop.xlane.xlu0 %923
        %v925 = vmax.f32 %v816, %v818
        %926 = vmax.xlane.f32.xlu0 %v925
        %v927 = vpop.xlane.xlu0 %926
        %v928 = vmax.f32 %v822, %v824
        %929 = vmax.xlane.f32.xlu0 %v928
        %v930 = vpop.xlane.xlu0 %929
        %v931 = vmax.f32 %v826, %v828
        %932 = vmax.xlane.f32.xlu0 %v931
        %v933 = vpop.xlane.xlu0 %932
        %v934 = vmax.f32 %v832, %v834
        %935 = vmax.xlane.f32.xlu0 %v934
        %v936 = vpop.xlane.xlu0 %935
        %v937 = vmax.f32 %v836, %v838
        %938 = vmax.xlane.f32.xlu0 %v937
        %v939 = vpop.xlane.xlu0 %938
        %v940 = vmax.f32 %v842, %v844
        %941 = vmax.xlane.f32.xlu0 %v940
        %v942 = vpop.xlane.xlu0 %941
        %v943 = vmax.f32 %v846, %v848
        %944 = vmax.xlane.f32.xlu0 %v943
        %v945 = vpop.xlane.xlu0 %944
        %v946 = vsub.f32 %v692, %v852
        %v947 = vsub.f32 %v694, %v852
        %v948 = vsub.f32 %v696, %v855
        %v949 = vsub.f32 %v698, %v855
        %v950 = vsub.f32 %v702, %v858
        %v951 = vsub.f32 %v704, %v858
        %v952 = vsub.f32 %v706, %v861
        %v953 = vsub.f32 %v708, %v861
        %v954 = vsub.f32 %v712, %v864
        %v955 = vsub.f32 %v714, %v864
        %v956 = vsub.f32 %v716, %v867
        %v957 = vsub.f32 %v718, %v867
        %v958 = vsub.f32 %v722, %v870
        %v959 = vsub.f32 %v724, %v870
        %v960 = vsub.f32 %v726, %v873
        %v961 = vsub.f32 %v728, %v873
        %v962 = vsub.f32 %v732, %v876
        %v963 = vsub.f32 %v734, %v876
        %v964 = vsub.f32 %v736, %v879
        %v965 = vsub.f32 %v738, %v879
        %v966 = vsub.f32 %v742, %v882
        %v967 = vsub.f32 %v744, %v882
        %v968 = vsub.f32 %v746, %v885
        %v969 = vsub.f32 %v748, %v885
        %v970 = vsub.f32 %v752, %v888
        %v971 = vsub.f32 %v754, %v888
        %v972 = vsub.f32 %v756, %v891
        %v973 = vsub.f32 %v758, %v891
        %v974 = vsub.f32 %v762, %v894
        %v975 = vsub.f32 %v764, %v894
        %v976 = vsub.f32 %v766, %v897
        %v977 = vsub.f32 %v768, %v897
        %v978 = vsub.f32 %v772, %v900
        %v979 = vsub.f32 %v774, %v900
        %v980 = vsub.f32 %v776, %v903
        %v981 = vsub.f32 %v778, %v903
        %v982 = vsub.f32 %v782, %v906
        %v983 = vsub.f32 %v784, %v906
        %v984 = vsub.f32 %v786, %v909
        %v985 = vsub.f32 %v788, %v909
        %v986 = vsub.f32 %v792, %v912
        %v987 = vsub.f32 %v794, %v912
        %v988 = vsub.f32 %v796, %v915
        %v989 = vsub.f32 %v798, %v915
        %v990 = vsub.f32 %v802, %v918
        %v991 = vsub.f32 %v804, %v918
        %v992 = vsub.f32 %v806, %v921
        %v993 = vsub.f32 %v808, %v921
        %v994 = vsub.f32 %v812, %v924
        %v995 = vsub.f32 %v814, %v924
        %v996 = vsub.f32 %v816, %v927
        %v997 = vsub.f32 %v818, %v927
        %v998 = vsub.f32 %v822, %v930
        %v999 = vsub.f32 %v824, %v930
        %v1000 = vsub.f32 %v826, %v933
        %v1001 = vsub.f32 %v828, %v933
        %v1002 = vsub.f32 %v832, %v936
        %v1003 = vsub.f32 %v834, %v936
        %v1004 = vsub.f32 %v836, %v939
        %v1005 = vsub.f32 %v838, %v939
        %v1006 = vsub.f32 %v842, %v942
        %v1007 = vsub.f32 %v844, %v942
        %v1008 = vsub.f32 %v846, %v945
        %v1009 = vsub.f32 %v848, %v945
        %v1010 = vmul.f32 %v946, 1.442695
        %v1011 = vpow.pop %v1010
        %v1012 = vmul.f32 %v947, 1.442695
        %v1013 = vpow.pop %v1012
        %v1014 = vmul.f32 %v948, 1.442695
        %v1015 = vpow.pop %v1014
        %v1016 = vmul.f32 %v949, 1.442695
        %v1017 = vpow.pop %v1016
        %v1018 = vmul.f32 %v950, 1.442695
        %v1019 = vpow.pop %v1018
        %v1020 = vmul.f32 %v951, 1.442695
        %v1021 = vpow.pop %v1020
        %v1022 = vmul.f32 %v952, 1.442695
        %v1023 = vpow.pop %v1022
        %v1024 = vmul.f32 %v953, 1.442695
        %v1025 = vpow.pop %v1024
        %v1026 = vmul.f32 %v954, 1.442695
        %v1027 = vpow.pop %v1026
        %v1028 = vmul.f32 %v955, 1.442695
        %v1029 = vpow.pop %v1028
        %v1030 = vmul.f32 %v956, 1.442695
        %v1031 = vpow.pop %v1030
        %v1032 = vmul.f32 %v957, 1.442695
        %v1033 = vpow.pop %v1032
        %v1034 = vmul.f32 %v958, 1.442695
        %v1035 = vpow.pop %v1034
        %v1036 = vmul.f32 %v959, 1.442695
        %v1037 = vpow.pop %v1036
        %v1038 = vmul.f32 %v960, 1.442695
        %v1039 = vpow.pop %v1038
        %v1040 = vmul.f32 %v961, 1.442695
        %v1041 = vpow.pop %v1040
        %v1042 = vmul.f32 %v962, 1.442695
        %v1043 = vpow.pop %v1042
        %v1044 = vmul.f32 %v963, 1.442695
        %v1045 = vpow.pop %v1044
        %v1046 = vmul.f32 %v964, 1.442695
        %v1047 = vpow.pop %v1046
        %v1048 = vmul.f32 %v965, 1.442695
        %v1049 = vpow.pop %v1048
        %v1050 = vmul.f32 %v966, 1.442695
        %v1051 = vpow.pop %v1050
        %v1052 = vmul.f32 %v967, 1.442695
        %v1053 = vpow.pop %v1052
        %v1054 = vmul.f32 %v968, 1.442695
        %v1055 = vpow.pop %v1054
        %v1056 = vmul.f32 %v969, 1.442695
        %v1057 = vpow.pop %v1056
        %v1058 = vmul.f32 %v970, 1.442695
        %v1059 = vpow.pop %v1058
        %v1060 = vmul.f32 %v971, 1.442695
        %v1061 = vpow.pop %v1060
        %v1062 = vmul.f32 %v972, 1.442695
        %v1063 = vpow.pop %v1062
        %v1064 = vmul.f32 %v973, 1.442695
        %v1065 = vpow.pop %v1064
        %v1066 = vmul.f32 %v974, 1.442695
        %v1067 = vpow.pop %v1066
        %v1068 = vmul.f32 %v975, 1.442695
        %v1069 = vpow.pop %v1068
        %v1070 = vmul.f32 %v976, 1.442695
        %v1071 = vpow.pop %v1070
        %v1072 = vmul.f32 %v977, 1.442695
        %v1073 = vpow.pop %v1072
        %v1074 = vmul.f32 %v978, 1.442695
        %v1075 = vpow.pop %v1074
        %v1076 = vmul.f32 %v979, 1.442695
        %v1077 = vpow.pop %v1076
        %v1078 = vmul.f32 %v980, 1.442695
        %v1079 = vpow.pop %v1078
        %v1080 = vmul.f32 %v981, 1.442695
        %v1081 = vpow.pop %v1080
        %v1082 = vmul.f32 %v982, 1.442695
        %v1083 = vpow.pop %v1082
        %v1084 = vmul.f32 %v983, 1.442695
        %v1085 = vpow.pop %v1084
        %v1086 = vmul.f32 %v984, 1.442695
        %v1087 = vpow.pop %v1086
        %v1088 = vmul.f32 %v985, 1.442695
        %v1089 = vpow.pop %v1088
        %v1090 = vmul.f32 %v986, 1.442695
        %v1091 = vpow.pop %v1090
        %v1092 = vmul.f32 %v987, 1.442695
        %v1093 = vpow.pop %v1092
        %v1094 = vmul.f32 %v988, 1.442695
        %v1095 = vpow.pop %v1094
        %v1096 = vmul.f32 %v989, 1.442695
        %v1097 = vpow.pop %v1096
        %v1098 = vmul.f32 %v990, 1.442695
        %v1099 = vpow.pop %v1098
        %v1100 = vmul.f32 %v991, 1.442695
        %v1101 = vpow.pop %v1100
        %v1102 = vmul.f32 %v992, 1.442695
        %v1103 = vpow.pop %v1102
        %v1104 = vmul.f32 %v993, 1.442695
        %v1105 = vpow.pop %v1104
        %v1106 = vmul.f32 %v994, 1.442695
        %v1107 = vpow.pop %v1106
        %v1108 = vmul.f32 %v995, 1.442695
        %v1109 = vpow.pop %v1108
        %v1110 = vmul.f32 %v996, 1.442695
        %v1111 = vpow.pop %v1110
        %v1112 = vmul.f32 %v997, 1.442695
        %v1113 = vpow.pop %v1112
        %v1114 = vmul.f32 %v998, 1.442695
        %v1115 = vpow.pop %v1114
        %v1116 = vmul.f32 %v999, 1.442695
        %v1117 = vpow.pop %v1116
        %v1118 = vmul.f32 %v1000, 1.442695
        %v1119 = vpow.pop %v1118
        %v1120 = vmul.f32 %v1001, 1.442695
        %v1121 = vpow.pop %v1120
        %v1122 = vmul.f32 %v1002, 1.442695
        %v1123 = vpow.pop %v1122
        %v1124 = vmul.f32 %v1003, 1.442695
        %v1125 = vpow.pop %v1124
        %v1126 = vmul.f32 %v1004, 1.442695
        %v1127 = vpow.pop %v1126
        %v1128 = vmul.f32 %v1005, 1.442695
        %v1129 = vpow.pop %v1128
        %v1130 = vmul.f32 %v1006, 1.442695
        %v1131 = vpow.pop %v1130
        %v1132 = vmul.f32 %v1007, 1.442695
        %v1133 = vpow.pop %v1132
        %v1134 = vmul.f32 %v1008, 1.442695
        %v1135 = vpow.pop %v1134
        %v1136 = vmul.f32 %v1009, 1.442695
        %v1137 = vpow.pop %v1136
        %v1138 = vpack.c.bf16 %v475, %v469
        %v1139 = vpack.c.bf16 %v477, %v471
        %v1140 = vpack.c.bf16 %v1015, %v1011
        %v1141 = vpack.c.bf16 %v1017, %v1013
        %v1142 = vpack.c.bf16 %v1023, %v1019
        %v1143 = vpack.c.bf16 %v1025, %v1021
        %v1144 = vpack.c.bf16 %v1031, %v1027
        %v1145 = vpack.c.bf16 %v1033, %v1029
        %v1146 = vpack.c.bf16 %v1039, %v1035
        %v1147 = vpack.c.bf16 %v1041, %v1037
        %v1148 = vpack.c.bf16 %v1047, %v1043
        %v1149 = vpack.c.bf16 %v1049, %v1045
        %v1150 = vpack.c.bf16 %v1055, %v1051
        %v1151 = vpack.c.bf16 %v1057, %v1053
        %v1152 = vpack.c.bf16 %v1063, %v1059
        %v1153 = vpack.c.bf16 %v1065, %v1061
        %v1154 = vpack.c.bf16 %v1071, %v1067
        %v1155 = vpack.c.bf16 %v1073, %v1069
        %v1156 = vpack.c.bf16 %v1079, %v1075
        %v1157 = vpack.c.bf16 %v1081, %v1077
        %v1158 = vpack.c.bf16 %v1087, %v1083
        %v1159 = vpack.c.bf16 %v1089, %v1085
        %v1160 = vpack.c.bf16 %v1095, %v1091
        %v1161 = vpack.c.bf16 %v1097, %v1093
        %v1162 = vpack.c.bf16 %v1103, %v1099
        %v1163 = vpack.c.bf16 %v1105, %v1101
        %v1164 = vpack.c.bf16 %v1111, %v1107
        %v1165 = vpack.c.bf16 %v1113, %v1109
        %v1166 = vpack.c.bf16 %v1119, %v1115
        %v1167 = vpack.c.bf16 %v1121, %v1117
        %v1168 = vpack.c.bf16 %v1127, %v1123
        %v1169 = vpack.c.bf16 %v1129, %v1125
        %v1170 = vpack.c.bf16 %v1135, %v1131
        %v1171 = vpack.c.bf16 %v1137, %v1133
        %1172 = vmatprep.subr.bf16.mxu0 %v1155
        %1173 = vmatpush1.bf16.xpose.msra.mxu0 %v1154
        %1174 = vmatprep.subr.bf16.mxu0 %v1153
        %1175 = vmatpush1.bf16.xpose.msra.mxu0 %v1152
        %1176 = vmatprep.subr.bf16.mxu0 %v1151
        %1177 = vmatpush1.bf16.xpose.msra.mxu0 %v1150
        %1178 = vmatprep.subr.bf16.mxu0 %v1149
        %1179 = vmatpush1.bf16.xpose.msra.mxu0 %v1148
        %1180 = vmatprep.subr.bf16.mxu0 %v1147
        %1181 = vmatpush1.bf16.xpose.msra.mxu0 %v1146
        %1182 = vmatprep.subr.bf16.mxu0 %v1145
        %1183 = vmatpush1.bf16.xpose.msra.mxu0 %v1144
        %1184 = vmatprep.subr.bf16.mxu0 %v1143
        %1185 = vmatpush1.bf16.xpose.msra.mxu0 %v1142
        %1186 = vmatprep.subr.bf16.mxu0 %v1141
        %1187 = vmatpush1.bf16.xpose.msra.mxu0 %v1140
        %1188 = vmatprep.subr.bf16.mxu0 %v1171
        %1189 = vmatpush2.bf16.xpose.msra.mxu0 %v1170
        %1190 = vmatprep.subr.bf16.mxu0 %v1169
        %1191 = vmatpush2.bf16.xpose.msra.mxu0 %v1168
        %1192 = vmatprep.subr.bf16.mxu0 %v1167
        %1193 = vmatpush2.bf16.xpose.msra.mxu0 %v1166
        %1194 = vmatprep.subr.bf16.mxu0 %v1165
        %1195 = vmatpush2.bf16.xpose.msra.mxu0 %v1164
        %1196 = vmatprep.subr.bf16.mxu0 %v1163
        %1197 = vmatpush2.bf16.xpose.msra.mxu0 %v1162
        %1198 = vmatprep.subr.bf16.mxu0 %v1161
        %1199 = vmatpush2.bf16.xpose.msra.mxu0 %v1160
        %1200 = vmatprep.subr.bf16.mxu0 %v1159
        %1201 = vmatpush2.bf16.xpose.msra.mxu0 %v1158
        %1202 = vmatprep.subr.bf16.mxu0 %v1157
        %1203 = vmatpush2.bf16.xpose.msra.mxu0 %v1156
        %1204 = vmatprep.mubr.bf16.mxu0 %v1139
        %1205 = vmatmul.mubr.bf16.gmra.mxu0 %v1138
        %v1206 = vpop.f32.mrf.mxu0
        %v1207 = vadd.f32 0.0, %v1206
        %v1208 = vpop.f32.mrf.mxu0
        %v1209 = vadd.f32 0.0, %v1208
        %v1210 = vpop.f32.mrf.mxu0
        %v1211 = vadd.f32 0.0, %v1210
        %v1212 = vpop.f32.mrf.mxu0
        %v1213 = vadd.f32 0.0, %v1212
        %1214 = vdwg.mxu0
        %v1215 = vrcp.pop %v1211
        %v1216 = vrcp.pop %v1213
        %v1217 = vlaneseq
        %v1218 = vshrl.u32 %v1217, 7
        %v1219 = vsub.s32 0, %v1218
        %v1220 = vrot.slane %v1215, %v1219
        %v1221 = vlaneseq
        %v1222 = vshrl.u32 %v1221, 7
        %v1223 = vsub.s32 0, %v1222
        %v1224 = vrot.slane %v1216, %v1223
        %v1225 = vmul.f32 %v1207, %v1220
        %v1226 = vmul.f32 %v1209, %v1224
        %v1227 = vld [vmem:[%s6] sm:$0xf]
        %v1228 = vld [vmem:[%s7] sm:$0xf]
        %1230 = vset.pattern.permute.xlu0 0
        %1231 = vperm.xlu0 %1230, %v1228
        %v1232 = vpop.permute.xlu0 %1231
        %v1235 = vsel %vm602, %v1227, 0
        %1237 = vmatprep.subr.mxu0 0.0
        %1238 = vmatpush1.msra.mxu0 0.0
        %1239 = vmatprep.subr.mxu0 0.0
        %1240 = vmatpush1.msra.mxu0 0.0
        %1241 = vmatprep.subr.mxu0 0.0
        %1242 = vmatpush1.msra.mxu0 0.0
        %1243 = vmatprep.subr.mxu0 0.0
        %1244 = vmatpush1.msra.mxu0 0.0
        %1245 = vmatprep.subr.mxu0 0.0
        %1246 = vmatpush1.msra.mxu0 0.0
        %1247 = vmatprep.subr.mxu0 0.0
        %1248 = vmatpush1.msra.mxu0 0.0
        %1249 = vmatprep.subr.mxu0 0.0
        %1250 = vmatpush1.msra.mxu0 0.0
        %1251 = vmatprep.subr.mxu0 0.0
        %1252 = vmatpush1.msra.mxu0 0.0
        %1253 = vmatprep.subr.mxu0 0.0
        %1254 = vmatpush1.msra.mxu0 0.0
        %1255 = vmatprep.subr.mxu0 0.0
        %1256 = vmatpush1.msra.mxu0 0.0
        %1257 = vmatprep.subr.mxu0 0.0
        %1258 = vmatpush1.msra.mxu0 0.0
        %1259 = vmatprep.subr.mxu0 0.0
        %1260 = vmatpush1.msra.mxu0 0.0
        %1261 = vmatprep.subr.mxu0 0.0
        %1262 = vmatpush1.msra.mxu0 0.0
        %1263 = vmatprep.subr.mxu0 0.0
        %1264 = vmatpush1.msra.mxu0 0.0
        %1265 = vmatprep.subr.mxu0 0.0
        %1266 = vmatpush1.msra.mxu0 0.0
        %1267 = vmatprep.subr.mxu0 %v1226
        %1268 = vmatpush1.msra.mxu0 %v1225
        %1269 = vmatprep.subr.mxu0 0.0
        %1270 = vmatpush2.msra.mxu0 0.0
        %1271 = vmatprep.subr.mxu0 0.0
        %1272 = vmatpush2.msra.mxu0 0.0
        %1273 = vmatprep.subr.mxu0 0.0
        %1274 = vmatpush2.msra.mxu0 0.0
        %1275 = vmatprep.subr.mxu0 0.0
        %1276 = vmatpush2.msra.mxu0 0.0
        %1277 = vmatprep.subr.mxu0 0.0
        %1278 = vmatpush2.msra.mxu0 0.0
        %1279 = vmatprep.subr.mxu0 0.0
        %1280 = vmatpush2.msra.mxu0 0.0
        %1281 = vmatprep.subr.mxu0 0.0
        %1282 = vmatpush2.msra.mxu0 0.0
        %1283 = vmatprep.subr.mxu0 0.0
        %1284 = vmatpush2.msra.mxu0 0.0
        %1285 = vmatprep.subr.mxu0 0.0
        %1286 = vmatpush2.msra.mxu0 0.0
        %1287 = vmatprep.subr.mxu0 0.0
        %1288 = vmatpush2.msra.mxu0 0.0
        %1289 = vmatprep.subr.mxu0 0.0
        %1290 = vmatpush2.msra.mxu0 0.0
        %1291 = vmatprep.subr.mxu0 0.0
        %1292 = vmatpush2.msra.mxu0 0.0
        %1293 = vmatprep.subr.mxu0 0.0
        %1294 = vmatpush2.msra.mxu0 0.0
        %1295 = vmatprep.subr.mxu0 0.0
        %1296 = vmatpush2.msra.mxu0 0.0
        %1297 = vmatprep.subr.mxu0 0.0
        %1298 = vmatpush2.msra.mxu0 0.0
        %1299 = vmatprep.subr.mxu0 0.0
        %1300 = vmatpush2.msra.mxu0 0.0
        %1301 = vmatprep.mubr.f32.mxu0 0.0
        %1302 = vmatmul.mubr.f32.gmra.mxu0 %v1235
        %v1303 = vpop.f32.mrf.mxu0
        %v1304 = vadd.f32 %v1232, %v1303
        %v1305 = vpop.f32.mrf.mxu0
        %v1306 = vadd.f32 %v1232, %v1305
        %1307 = vdwg.mxu0
        %v1309 = vadd.f32 %v1304, %v357
        %v1310 = vadd.f32 %v1306, %v487
        %v1313 = vcombine.low %v1309, %v1310
        %1315 = vst [vmem:[%s338] sm:$0xff] %v1313
        %s1316 = sand.u32 %s224, 1
        %s1317 = scalar_lea.sflag [#allocation3], %s1316
        %s1318 = sand.u32 %s224, 1
        %s1319 = smul.addr %s1318, 8
        %s1320 = scalar_lea.vmem [#allocation2], %s1319
        // Predicated region
        $region53: #{tpu_custom_call.1} parent=51 // pred_check
          %p1321 = pneg %p234
        $region54: #{tpu_custom_call.1} parent=51 // pred_check_branch
          %1323 = sbr.rel (%p1321) target = $region56
        $region55: #{tpu_custom_call.1} parent=51 // pred_region
          %s1324 = smul.u32 2, %s27
          %s1326 = ssub.s32 128, 128
          %1327 = vsyncadd %s1317, %s1326
          %s1328 = smul.addr %s26, 2
          %s1329 = sadd.s32 %s1324, %s1328
          %s1330 = smul.addr %s1329, 64
          %s1331 = scalar_lea.hbm %s8, %s1330
          %s1333 = sshll.u32 %s1320, 4
          %s1334 = int_to_ptr.vmem [resolvable:$true] %s1333
          %1336 = dma.vmem_to_hbm [thread:$0]  %s1334, 128, %s1331, %s1317
        $region56: #{tpu_custom_call.1} parent=51 // pred_fallthru
          _
      $region52: #{tpu_custom_call.1} parent=5 // pred_fallthru
        _
      %p1337 = scmp.le.s32.totalorder 2, %s17
      // Predicated region
      $region57: #{tpu_custom_call.1} parent=5 // pred_check
        %p1338 = pneg %p1337
      $region58: #{tpu_custom_call.1} parent=5 // pred_check_branch
        %1340 = sbr.rel (%p1338) target = $region60
      $region59: #{tpu_custom_call.1} parent=5 // pred_region
        %s1341 = ssub.s32 %s17, 2
        // Predicated region
        $region61: #{tpu_custom_call.1} parent=59 // pred_check
          %p1342 = pneg %p240
        $region62: #{tpu_custom_call.1} parent=59 // pred_check_branch
          %1344 = sbr.rel (%p1342) target = $region64
        $region63: #{tpu_custom_call.1} parent=59 // pred_region
          %s1345 = sand.u32 %s225, 1
          %s1346 = scalar_lea.sflag [#allocation3], %s1345
          %s1347 = sand.u32 %s225, 1
          %s1348 = smul.addr %s1347, 8
          %s1349 = scalar_lea.vmem [#allocation2], %s1348
          %1350 = dma.done %s1346, 128
        $region64: #{tpu_custom_call.1} parent=59 // pred_fallthru
          _
      $region60: #{tpu_custom_call.1} parent=5 // pred_fallthru
        _
    $region6: #{tpu_custom_call.1} parent=1 // loop_footer
      %s21 = sadd.s32 1, %s17
    $region7: #{tpu_custom_call.1} parent=1 // loop_footer_branch
      %16 = sbr.rel target = $region3
    $region8: #{tpu_custom_call.1} parent=1 // loop_exit
      _
    %1351 = vsyncpa [#allocation3], 1
    %s1352 = scalar_lea.sflag [#allocation3], 1
    %1353 = vsyncpa %s1352, 1

</llo_original>
